<compile_context>
chip_gen: v5e
topology: v5e:2x2
jax: 0.10.0
libtpu: 0.0.40
codegen_flags: <defaults>
</compile_context>

<pallas_src>
import functools

import jax
import jax.numpy as jnp
from jax import lax
from jax.experimental import pallas as pl
from jax.experimental.pallas import tpu as pltpu

LANE = 128


def init_params(key, token_len, embedding_size=4):
    """One (vocab_i, E) table per categorical feature, xavier_normal_ init."""
    tables = []
    for tl in token_len:
        key, sub = jax.random.split(key)
        vocab = int(tl) + 1
        std = (2.0 / (vocab + embedding_size)) ** 0.5        # nn.init.xavier_normal_
        tables.append(std * jax.random.normal(sub, (vocab, embedding_size),
                                              jnp.float32))
    return tables


def prepare_avitor_cat(tables):
    """One-time packing of the embedding tables (hoisted out of forward).

    Returns a dict with:
      tableT  : (E, V_pad) f32 -- feature i's table transposed, its columns
                living in [offsets[i], offsets[i] + vpads[i]), lane-padded to
                a multiple of 128 (padding columns are zero).
      offsets : static per-feature column offsets (multiples of 128)
      vpads   : static per-feature padded vocab sizes (multiples of 128)
    """
    E = int(tables[0].shape[1])
    cols, offsets, vpads = [], [], []
    off = 0
    for t in tables:
        v = int(t.shape[0])
        vpad = max(LANE, ((v + LANE - 1) // LANE) * LANE)
        tT = jnp.transpose(t).astype(jnp.float32)            # (E, v)
        tT = jnp.pad(tT, ((0, 0), (0, vpad - v)))            # (E, vpad)
        cols.append(tT)
        offsets.append(off)
        vpads.append(vpad)
        off += vpad
    tableT = jnp.concatenate(cols, axis=1)                   # (E, V_pad)
    return {
        "tableT": tableT,
        "offsets": tuple(offsets),
        "vpads": tuple(vpads),
        "E": E,
        "F": len(tables),
    }


def _avitor_cat_kernel(idx_ref, tab_ref, out_ref, *, offsets, vpads, E, F,
                       tB, out_pad):
    """Fused per-feature embedding lookup for one batch tile.

    idx_ref : (tB, F)      int32 -- raw per-feature token ids
    tab_ref : (E, V_pad)   f32   -- transposed, lane-padded combined table
    out_ref : (tB, out_pad) f32  -- feature i at lanes [i*E, (i+1)*E), rest 0
    """
    pieces = []
    for i in range(F):                                        # static, unrolled
        idx_i = idx_ref[:, i:i + 1]                           # (tB, 1) int32
        col = lax.broadcasted_iota(jnp.int32, (tB, vpads[i]), 1)
        onehot = (col == idx_i).astype(jnp.float32)           # (tB, vpad_i) exact 0/1
        tbl_i = tab_ref[:, offsets[i]:offsets[i] + vpads[i]]  # (E, vpad_i) free view
        # Contract the (lane-dense) vocab axis of both operands on the MXU.
        emb_i = jnp.einsum("bv,ev->be", onehot, tbl_i,
                           preferred_element_type=jnp.float32)  # (tB, E)
        pieces.append(emb_i)
    slab = jnp.concatenate(pieces, axis=1)                    # (tB, F*E)
    if out_pad > F * E:
        slab = jnp.concatenate(
            [slab, jnp.zeros((tB, out_pad - F * E), jnp.float32)], axis=1)
    out_ref[...] = slab                                       # single lane-dense store


def avitor_cat_forward(x, prep):
    """Matches AvitorCat.forward: returns [table_i[x[:, i]] for each feature i]."""
    tableT = prep["tableT"]
    offsets, vpads = prep["offsets"], prep["vpads"]
    E, F = prep["E"], prep["F"]

    B = int(x.shape[0])
    assert int(x.shape[1]) == F
    V_pad = int(tableT.shape[1])

    out_dim = F * E
    out_pad = max(LANE, ((out_dim + LANE - 1) // LANE) * LANE)

    # Batch tile: big enough to amortize per-step overhead, small enough to
    # bound the (tB x 128) one-hot scratch + double buffers on every gen
    # (incl. v7x's 64 MiB VMEM).
    tB = min(512, B)
    B_pad = ((B + tB - 1) // tB) * tB
    xi = x.astype(jnp.int32)
    if B_pad != B:
        xi = jnp.pad(xi, ((0, B_pad - B), (0, 0)))            # pad ids are 0 (valid)

    kernel = functools.partial(_avitor_cat_kernel, offsets=offsets, vpads=vpads,
                               E=E, F=F, tB=tB, out_pad=out_pad)

    out = pl.pallas_call(
        kernel,
        out_shape=jax.ShapeDtypeStruct((B_pad, out_pad), jnp.float32),
        grid=(B_pad // tB,),
        in_specs=[
            pl.BlockSpec((tB, F), lambda i: (i, 0)),          # batch-tiled indices
            pl.BlockSpec((E, V_pad), lambda i: (0, 0)),       # table stays resident
        ],
        out_specs=pl.BlockSpec((tB, out_pad), lambda i: (i, 0)),
        compiler_params=pltpu.CompilerParams(
            dimension_semantics=("parallel",),                # megacore / v7x 2 TCs
            vmem_limit_bytes=32 * 1024 * 1024,
        ),
    )(xi, tableT)

    out3 = out[:B, :out_dim].reshape(B, F, E)
    return [out3[:, i, :] for i in range(F)]


# ----------------------- pure-JAX reference (for checking) -----------------------
def _avitor_cat_ref(x, tables):
    return [jnp.take(tables[i], x[:, i], axis=0) for i in range(len(tables))]


if __name__ == "__main__":
    # Small shapes consistent with the module: 4 categorical features,
    # embedding_size=4, batch=8.
    token_len = [11, 7, 19, 5]
    embedding_size = 4
    batch = 8
    n_features = len(token_len)

    key = jax.random.PRNGKey(0)

    # Deterministic integer inputs, column i in [0, token_len[i]] (vocab = tl+1).
    cols = []
    for tl in token_len:
        key, sub = jax.random.split(key)
        cols.append(jax.random.randint(sub, (batch,), 0, int(tl) + 1, jnp.int32))
    x = jnp.stack(cols, axis=1)                               # (batch, n_features)

    tables = init_params(key, token_len, embedding_size)
    prep = prepare_avitor_cat(tables)                         # one-time packing

    outs = avitor_cat_forward(x, prep)
    outs = [jax.block_until_ready(o) for o in outs]

    refs = _avitor_cat_ref(x, tables)
    assert len(outs) == n_features
    for o, r in zip(outs, refs):
        assert o.shape == (batch, embedding_size), o.shape
        assert jnp.allclose(o, r, atol=1e-6, rtol=1e-6), float(jnp.max(jnp.abs(o - r)))

    print("KERNEL_OK")
</pallas_src>

<mosaic_0001>
module attributes {stable_mosaic.version = 11 : i64} {
  func.func @_avitor_cat_kernel(%arg0: i32, %arg1: memref<8x4xi32, #tpu.memory_space<vmem>>, %arg2: memref<4x512xf32, #tpu.memory_space<vmem>>, %arg3: memref<8x128xf32, #tpu.memory_space<vmem>>) attributes {dimension_semantics = [#tpu.dimension_semantics<parallel>], iteration_bounds = array<i64: 1>, scalar_prefetch = 0 : i64, scratch_operands = 0 : i64, tpu.core_type = #tpu.core_type<tc>, window_params = [{transform_indices = @transform_0, window_bounds = array<i64: 8, 4>}, {pipeline_mode = #tpu.pipeline_mode<synchronous>, transform_indices = @transform_1, window_bounds = array<i64: 4, 512>}, {transform_indices = @transform_2, window_bounds = array<i64: 8, 128>}]} {
    %c0 = arith.constant 0 : index
    %c0_0 = arith.constant 0 : index
    %0 = vector.load %arg1[%c0, %c0_0] : memref<8x4xi32, #tpu.memory_space<vmem>>, vector<8x1xi32>
    %1 = tpu.iota {dimensions = array<i32: 1>} : vector<8x128xi32>
    %2 = vector.broadcast %0 : vector<8x1xi32> to vector<8x128xi32>
    %3 = arith.cmpi eq, %1, %2 : vector<8x128xi32>
    %4 = arith.extui %3 : vector<8x128xi1> to vector<8x128xi32>
    %5 = arith.sitofp %4 : vector<8x128xi32> to vector<8x128xf32>
    %c0_1 = arith.constant 0 : index
    %c0_2 = arith.constant 0 : index
    %6 = vector.load %arg2[%c0_1, %c0_2] : memref<4x512xf32, #tpu.memory_space<vmem>>, vector<4x128xf32>
    "tpu.trace_start"() <{level = 10 : i32, message = "bv,ev->be"}> : () -> ()
    %cst = arith.constant dense<0.000000e+00> : vector<8x4xf32>
    %7 = tpu.matmul %5, %6, %cst {dimension_numbers = #tpu.dot_dimension_numbers<[1], [1], [0], [0], [0, 0, 1, 0], [], []>} : vector<8x128xf32>, vector<4x128xf32>, vector<8x4xf32> -> vector<8x4xf32>
    "tpu.trace_stop"() : () -> ()
    %c0_3 = arith.constant 0 : index
    %c1 = arith.constant 1 : index
    %8 = vector.load %arg1[%c0_3, %c1] : memref<8x4xi32, #tpu.memory_space<vmem>>, vector<8x1xi32>
    %9 = tpu.iota {dimensions = array<i32: 1>} : vector<8x128xi32>
    %10 = vector.broadcast %8 : vector<8x1xi32> to vector<8x128xi32>
    %11 = arith.cmpi eq, %9, %10 : vector<8x128xi32>
    %12 = arith.extui %11 : vector<8x128xi1> to vector<8x128xi32>
    %13 = arith.sitofp %12 : vector<8x128xi32> to vector<8x128xf32>
    %c0_4 = arith.constant 0 : index
    %c128 = arith.constant 128 : index
    %14 = vector.load %arg2[%c0_4, %c128] : memref<4x512xf32, #tpu.memory_space<vmem>>, vector<4x128xf32>
    "tpu.trace_start"() <{level = 10 : i32, message = "bv,ev->be"}> : () -> ()
    %cst_5 = arith.constant dense<0.000000e+00> : vector<8x4xf32>
    %15 = tpu.matmul %13, %14, %cst_5 {dimension_numbers = #tpu.dot_dimension_numbers<[1], [1], [0], [0], [0, 0, 1, 0], [], []>} : vector<8x128xf32>, vector<4x128xf32>, vector<8x4xf32> -> vector<8x4xf32>
    "tpu.trace_stop"() : () -> ()
    %c0_6 = arith.constant 0 : index
    %c2 = arith.constant 2 : index
    %16 = vector.load %arg1[%c0_6, %c2] : memref<8x4xi32, #tpu.memory_space<vmem>>, vector<8x1xi32>
    %17 = tpu.iota {dimensions = array<i32: 1>} : vector<8x128xi32>
    %18 = vector.broadcast %16 : vector<8x1xi32> to vector<8x128xi32>
    %19 = arith.cmpi eq, %17, %18 : vector<8x128xi32>
    %20 = arith.extui %19 : vector<8x128xi1> to vector<8x128xi32>
    %21 = arith.sitofp %20 : vector<8x128xi32> to vector<8x128xf32>
    %c0_7 = arith.constant 0 : index
    %c256 = arith.constant 256 : index
    %22 = vector.load %arg2[%c0_7, %c256] : memref<4x512xf32, #tpu.memory_space<vmem>>, vector<4x128xf32>
    "tpu.trace_start"() <{level = 10 : i32, message = "bv,ev->be"}> : () -> ()
    %cst_8 = arith.constant dense<0.000000e+00> : vector<8x4xf32>
    %23 = tpu.matmul %21, %22, %cst_8 {dimension_numbers = #tpu.dot_dimension_numbers<[1], [1], [0], [0], [0, 0, 1, 0], [], []>} : vector<8x128xf32>, vector<4x128xf32>, vector<8x4xf32> -> vector<8x4xf32>
    "tpu.trace_stop"() : () -> ()
    %c0_9 = arith.constant 0 : index
    %c3 = arith.constant 3 : index
    %24 = vector.load %arg1[%c0_9, %c3] : memref<8x4xi32, #tpu.memory_space<vmem>>, vector<8x1xi32>
    %25 = tpu.iota {dimensions = array<i32: 1>} : vector<8x128xi32>
    %26 = vector.broadcast %24 : vector<8x1xi32> to vector<8x128xi32>
    %27 = arith.cmpi eq, %25, %26 : vector<8x128xi32>
    %28 = arith.extui %27 : vector<8x128xi1> to vector<8x128xi32>
    %29 = arith.sitofp %28 : vector<8x128xi32> to vector<8x128xf32>
    %c0_10 = arith.constant 0 : index
    %c384 = arith.constant 384 : index
    %30 = vector.load %arg2[%c0_10, %c384] : memref<4x512xf32, #tpu.memory_space<vmem>>, vector<4x128xf32>
    "tpu.trace_start"() <{level = 10 : i32, message = "bv,ev->be"}> : () -> ()
    %cst_11 = arith.constant dense<0.000000e+00> : vector<8x4xf32>
    %31 = tpu.matmul %29, %30, %cst_11 {dimension_numbers = #tpu.dot_dimension_numbers<[1], [1], [0], [0], [0, 0, 1, 0], [], []>} : vector<8x128xf32>, vector<4x128xf32>, vector<8x4xf32> -> vector<8x4xf32>
    "tpu.trace_stop"() : () -> ()
    %32 = tpu.concatenate %7, %15, %23, %31 in 1 : vector<8x4xf32>, vector<8x4xf32>, vector<8x4xf32>, vector<8x4xf32> -> vector<8x16xf32>
    %cst_12 = arith.constant 0.000000e+00 : f32
    %33 = vector.broadcast %cst_12 : f32 to vector<8x112xf32>
    %34 = tpu.concatenate %32, %33 in 1 : vector<8x16xf32>, vector<8x112xf32> -> vector<8x128xf32>
    %c0_13 = arith.constant 0 : index
    %c0_14 = arith.constant 0 : index
    %35 = vector.load %arg3[%c0_13, %c0_14] : memref<8x128xf32, #tpu.memory_space<vmem>>, vector<8x128xf32>
    tpu.vector_store %arg3[%c0_13, %c0_14], %34 {strides = array<i32>} : memref<8x128xf32, #tpu.memory_space<vmem>>, vector<8x128xf32>,
    return
  }
  func.func @transform_0(%arg0: i32) -> (i32, i32) {
    %c0_i32 = arith.constant 0 : i32
    %c0_i32_0 = arith.constant 0 : i32
    return %arg0, %c0_i32 : i32, i32
  }
  func.func @transform_1(%arg0: i32) -> (i32, i32) {
    %c0_i32 = arith.constant 0 : i32
    %c0_i32_0 = arith.constant 0 : i32
    %c0_i32_1 = arith.constant 0 : i32
    return %c0_i32, %c0_i32_0 : i32, i32
  }
  func.func @transform_2(%arg0: i32) -> (i32, i32) {
    %c0_i32 = arith.constant 0 : i32
    %c0_i32_0 = arith.constant 0 : i32
    return %arg0, %c0_i32 : i32, i32
  }
}

</mosaic_0001>

<llo_original>
// kernel: tpu_custom_call.1
$region0: #{tpu_custom_call.1}
  #allocation0 [shape = 'u32[]', space=smem, size = 0x4, offset = 0x4, fixed_abs, tag = 'smem constant byte address 0x4 - core index']
  #allocation1 [shape = 'u32[72,128]{1,0:T(1,128)}', space=vmem, size = 0x9000, scoped, tag = 'internal scratch']
  %s0 = inlined_call_operand.vmem [shape: s32[8,4], index: 0, kind: input, shape index: {}]
  %s1 = inlined_call_operand.hbm [shape: f32[4,512], index: 1, kind: input, shape index: {}]
  %s2 = inlined_call_operand.hbm [shape: f32[8,128], index: 2, kind: output, shape index: {}]
  %s3 = sld [smem:[#allocation0]]
  $region22: #{tpu_custom_call.1} parent=0
    _
  %s5 = ssub.s32 1, %s3
  %s6 = scalar_select 0, %s5, %s3
  $region1: #{tpu_custom_call.1} parent=0
    #allocation2 [shape = 'u8[8192]{0}', space=vmem, size = 0x2000, scoped, tag = 'input window, operand 1, single buffered']
    #allocation3 [shape = 's32[1]{0}', space=sflag, size = 0x4, scoped, tag = 'scoped memory for tpu_custom_call.1']
    #allocation4 [shape = 's32[1]{0}', space=sflag, size = 0x4, scoped, tag = 'scoped memory for tpu_custom_call.1']
    #allocation5 [shape = 'u8[4096]{0}', space=vmem, size = 0x1000, scoped, tag = 'output window, operand 0, single buffered']
    %7 = vsyncpa [#allocation3], 0
    %8 = vsyncpa [#allocation4], 0
    // Predicated region
    $region2: #{tpu_custom_call.1} parent=1 // pred_check
      _
    $region3: #{tpu_custom_call.1} parent=1 // pred_check_branch
      %10 = sbr.rel (0) target = $region5
    $region4: #{tpu_custom_call.1} parent=1 // pred_region
      _
    $region5: #{tpu_custom_call.1} parent=1 // pred_fallthru
      _
    // Predicated region
    $region6: #{tpu_custom_call.1} parent=1 // pred_check
      _
    $region7: #{tpu_custom_call.1} parent=1 // pred_check_branch
      %12 = sbr.rel (0) target = $region9
    $region8: #{tpu_custom_call.1} parent=1 // pred_region
      %14 = vsyncadd [#allocation3], 0
      %s16 = sshll.u32 %s1, 4
      %s17 = int_to_ptr.hbm [resolvable:$true] %s16
      %s18 = sshll.u32 [#allocation2], 4
      %s19 = int_to_ptr.vmem [resolvable:$true] %s18
      %21 = dma.hbm_to_vmem [thread:$0]  %s17, 256, %s19, [#allocation3]
    $region9: #{tpu_custom_call.1} parent=1 // pred_fallthru
      _
    // Predicated region
    $region10: #{tpu_custom_call.1} parent=1 // pred_check
      _
    $region11: #{tpu_custom_call.1} parent=1 // pred_check_branch
      %23 = sbr.rel (0) target = $region13
    $region12: #{tpu_custom_call.1} parent=1 // pred_region
      %25 = dma.done [#allocation3], 256
    $region13: #{tpu_custom_call.1} parent=1 // pred_fallthru
      _
    %v26 = vld [vmem:[%s0] sm:$0xff]
    %v27 = vlaneseq
    %v28 = vand.u32 %v27, 127
    %29 = vset.pattern.permute.xlu0 0
    %30 = vperm.xlu0 %29, %v26
    %v31 = vpop.permute.xlu0 %30
    %vm32 = vcmp.eq.s32.totalorder %v28, %v31
    %v33 = vsel %vm32, 1, 0
    %v34 = vcvt.s32.f32 %v33
    %v35 = vld [vmem:[#allocation2] sm:$0xf]
    %36 = vmatpush.xpose.msra.mxu0 0.0
    %37 = vmatpush.xpose.msra.mxu0 0.0
    %38 = vmatpush.xpose.msra.mxu0 0.0
    %39 = vmatpush.xpose.msra.mxu0 0.0
    %40 = vmatpush.xpose.msra.mxu0 0.0
    %41 = vmatpush.xpose.msra.mxu0 0.0
    %42 = vmatpush.xpose.msra.mxu0 0.0
    %43 = vmatpush.xpose.msra.mxu0 0.0
    %44 = vmatpush.xpose.msra.mxu0 0.0
    %45 = vmatpush.xpose.msra.mxu0 0.0
    %46 = vmatpush.xpose.msra.mxu0 0.0
    %47 = vmatpush.xpose.msra.mxu0 0.0
    %48 = vmatpush.xpose.msra.mxu0 0.0
    %49 = vmatpush.xpose.msra.mxu0 0.0
    %50 = vmatpush.xpose.msra.mxu0 0.0
    %51 = vmatpush.xpose.msra.mxu0 %v35
    %52 = vmatmul.f32.gmra.mxu0 %v34
    %v53 = vpop.f32.mrf.mxu0
    %v54 = vadd.f32 0.0, %v53
    %55 = vdwg.mxu0
    %v56 = vld [vmem:[%s0] sm:$0xff]
    %57 = vset.pattern.permute.xlu0 1
    %58 = vperm.xlu0 %57, %v56
    %v59 = vpop.permute.xlu0 %58
    %vm60 = vcmp.eq.s32.totalorder %v28, %v59
    %v61 = vsel %vm60, 1, 0
    %v62 = vcvt.s32.f32 %v61
    %v63 = vld [vmem:[#allocation2 + $0x4] sm:$0xf]
    %64 = vmatpush.xpose.msra.mxu0 0.0
    %65 = vmatpush.xpose.msra.mxu0 0.0
    %66 = vmatpush.xpose.msra.mxu0 0.0
    %67 = vmatpush.xpose.msra.mxu0 0.0
    %68 = vmatpush.xpose.msra.mxu0 0.0
    %69 = vmatpush.xpose.msra.mxu0 0.0
    %70 = vmatpush.xpose.msra.mxu0 0.0
    %71 = vmatpush.xpose.msra.mxu0 0.0
    %72 = vmatpush.xpose.msra.mxu0 0.0
    %73 = vmatpush.xpose.msra.mxu0 0.0
    %74 = vmatpush.xpose.msra.mxu0 0.0
    %75 = vmatpush.xpose.msra.mxu0 0.0
    %76 = vmatpush.xpose.msra.mxu0 0.0
    %77 = vmatpush.xpose.msra.mxu0 0.0
    %78 = vmatpush.xpose.msra.mxu0 0.0
    %79 = vmatpush.xpose.msra.mxu0 %v63
    %80 = vmatmul.f32.gmra.mxu0 %v62
    %v81 = vpop.f32.mrf.mxu0
    %v82 = vadd.f32 0.0, %v81
    %83 = vdwg.mxu0
    %v84 = vld [vmem:[%s0] sm:$0xff]
    %85 = vset.pattern.permute.xlu0 2
    %86 = vperm.xlu0 %85, %v84
    %v87 = vpop.permute.xlu0 %86
    %vm88 = vcmp.eq.s32.totalorder %v28, %v87
    %v89 = vsel %vm88, 1, 0
    %v90 = vcvt.s32.f32 %v89
    %v91 = vld [vmem:[#allocation2 + $0x8] sm:$0xf]
    %92 = vmatpush.xpose.msra.mxu0 0.0
    %93 = vmatpush.xpose.msra.mxu0 0.0
    %94 = vmatpush.xpose.msra.mxu0 0.0
    %95 = vmatpush.xpose.msra.mxu0 0.0
    %96 = vmatpush.xpose.msra.mxu0 0.0
    %97 = vmatpush.xpose.msra.mxu0 0.0
    %98 = vmatpush.xpose.msra.mxu0 0.0
    %99 = vmatpush.xpose.msra.mxu0 0.0
    %100 = vmatpush.xpose.msra.mxu0 0.0
    %101 = vmatpush.xpose.msra.mxu0 0.0
    %102 = vmatpush.xpose.msra.mxu0 0.0
    %103 = vmatpush.xpose.msra.mxu0 0.0
    %104 = vmatpush.xpose.msra.mxu0 0.0
    %105 = vmatpush.xpose.msra.mxu0 0.0
    %106 = vmatpush.xpose.msra.mxu0 0.0
    %107 = vmatpush.xpose.msra.mxu0 %v91
    %108 = vmatmul.f32.gmra.mxu0 %v90
    %v109 = vpop.f32.mrf.mxu0
    %v110 = vadd.f32 0.0, %v109
    %111 = vdwg.mxu0
    %v112 = vld [vmem:[%s0] sm:$0xff]
    %113 = vset.pattern.permute.xlu0 3
    %114 = vperm.xlu0 %113, %v112
    %v115 = vpop.permute.xlu0 %114
    %vm116 = vcmp.eq.s32.totalorder %v28, %v115
    %v117 = vsel %vm116, 1, 0
    %v118 = vcvt.s32.f32 %v117
    %v119 = vld [vmem:[#allocation2 + $0xc] sm:$0xf]
    %120 = vmatpush.xpose.msra.mxu0 0.0
    %121 = vmatpush.xpose.msra.mxu0 0.0
    %122 = vmatpush.xpose.msra.mxu0 0.0
    %123 = vmatpush.xpose.msra.mxu0 0.0
    %124 = vmatpush.xpose.msra.mxu0 0.0
    %125 = vmatpush.xpose.msra.mxu0 0.0
    %126 = vmatpush.xpose.msra.mxu0 0.0
    %127 = vmatpush.xpose.msra.mxu0 0.0
    %128 = vmatpush.xpose.msra.mxu0 0.0
    %129 = vmatpush.xpose.msra.mxu0 0.0
    %130 = vmatpush.xpose.msra.mxu0 0.0
    %131 = vmatpush.xpose.msra.mxu0 0.0
    %132 = vmatpush.xpose.msra.mxu0 0.0
    %133 = vmatpush.xpose.msra.mxu0 0.0
    %134 = vmatpush.xpose.msra.mxu0 0.0
    %135 = vmatpush.xpose.msra.mxu0 %v119
    %136 = vmatmul.f32.gmra.mxu0 %v118
    %v137 = vpop.f32.mrf.mxu0
    %v138 = vadd.f32 0.0, %v137
    %139 = vdwg.mxu0
    %141 = vrot.lane.b32.xlu0 %v82, 4
    %v142 = vpop.permute.xlu0 %141
    %145 = vrot.lane.b32.xlu0 %v110, 8
    %v146 = vpop.permute.xlu0 %145
    %149 = vrot.lane.b32.xlu0 %v138, 12
    %v150 = vpop.permute.xlu0 %149
    %vm152 = vcmask 31744
    %v153 = vsel %vm152, %v54, %v142
    %vm154 = vcmask 64512
    %v155 = vsel %vm154, %v153, %v146
    %vm156 = vcmask 97280
    %v157 = vsel %vm156, %v155, %v150
    %vm158 = vcmask 130048
    %v159 = vsel %vm158, %v157, 0.0
    %160 = vst [vmem:[#allocation5] sm:$0xff] %v159
    // Predicated region
    $region14: #{tpu_custom_call.1} parent=1 // pred_check
      _
    $region15: #{tpu_custom_call.1} parent=1 // pred_check_branch
      %162 = sbr.rel (0) target = $region17
    $region16: #{tpu_custom_call.1} parent=1 // pred_region
      %164 = vsyncadd [#allocation4], 0
      %s166 = sshll.u32 [#allocation5], 4
      %s167 = int_to_ptr.vmem [resolvable:$true] %s166
      %s168 = sshll.u32 %s2, 4
      %s169 = int_to_ptr.hbm [resolvable:$true] %s168
      %171 = dma.vmem_to_hbm [thread:$0]  %s167, 128, %s169, [#allocation4]
    $region17: #{tpu_custom_call.1} parent=1 // pred_fallthru
      _
    // Predicated region
    $region18: #{tpu_custom_call.1} parent=1 // pred_check
      _
    $region19: #{tpu_custom_call.1} parent=1 // pred_check_branch
      %173 = sbr.rel (0) target = $region21
    $region20: #{tpu_custom_call.1} parent=1 // pred_region
      %175 = dma.done [#allocation4], 128
    $region21: #{tpu_custom_call.1} parent=1 // pred_fallthru
      _
    %176 = vsyncpa [#allocation3], 1
    %177 = vsyncpa [#allocation4], 1

</llo_original>
